<compile_context>
chip_gen: v6e
topology: v6e:2x2x1
jax: 0.10.0
libtpu: 0.0.40
codegen_flags: <defaults>
</compile_context>

<pallas_src>
import functools

import jax
import jax.numpy as jnp
from jax import lax
from jax.experimental import pallas as pl
from jax.experimental.pallas import tpu as pltpu


def _encoder_seq_kernel(acts_ref, w_ih_ref, b_ih_ref, b_hh_ref, w_hh_ref,
                        w_proj_ref, b_proj_ref, mu_ref, std_ref):
    """Fused LSTM recurrence + linear head + (mu, softplus) epilogue, all in VMEM.

    acts_ref   : (B, 2*T) f32   actions, time-flattened [x_{t,0}, x_{t,1}] pairs
    w_ih_ref   : (2, 4H)  f32   input-to-hidden weights, gate order [i, f, g, o]
    b_ih_ref   : (1, 4H)  f32
    b_hh_ref   : (1, 4H)  f32
    w_hh_ref   : (H, 4H)  f32   hidden-to-hidden weights (h @ W_hh)
    w_proj_ref : (H, 2E)  f32   projection weights
    b_proj_ref : (1, 2E)  f32
    mu_ref     : (B, E)   f32   output mean
    std_ref    : (B, E)   f32   output scale = softplus(second half of projection)
    """
    B = acts_ref.shape[0]
    T = acts_ref.shape[1] // 2
    H, G = w_hh_ref.shape            # G == 4*H == 128 for hidden_size=32 (one vreg)
    E = mu_ref.shape[1]

    # ---- hoisted loop-invariant values ------------------------------------------
    col = lax.broadcasted_iota(jnp.int32, (B, G), 1)
    is_g = jnp.logical_and(col >= 2 * H, col < 3 * H)        # the tanh ("g") gate block
    # sigmoid(x) = 0.5*tanh(0.5*x) + 0.5  ->  one tanh covers all four gate blocks.
    pre_scale = jnp.where(is_g, 1.0, 0.5).astype(jnp.float32)    # also the post-scale
    post_shift = jnp.where(is_g, 0.0, 0.5).astype(jnp.float32)
    w0 = jnp.broadcast_to(w_ih_ref[0:1, :], (B, G))              # weight row for x[:, 0]
    w1 = jnp.broadcast_to(w_ih_ref[1:2, :], (B, G))              # weight row for x[:, 1]
    bias = jnp.broadcast_to(b_ih_ref[...] + b_hh_ref[...], (B, G))

    h = jnp.zeros((B, H), jnp.float32)
    c = jnp.zeros((B, H), jnp.float32)

    # T is static & tiny: full static unroll, static lane offsets for the inputs.
    for t in range(T):
        x0 = acts_ref[:, 2 * t:2 * t + 1]          # (B, 1)
        x1 = acts_ref[:, 2 * t + 1:2 * t + 2]      # (B, 1)
        # Input contribution: K=2 -> two broadcasted VPU FMAs (never an MXU matmul).
        gates = (x0 * w0 + x1 * w1 + bias
                 + jnp.dot(h, w_hh_ref[...], preferred_element_type=jnp.float32))
        th = jnp.tanh(gates * pre_scale)            # one full-width EUP push
        act = th * pre_scale + post_shift           # [sig(i) | sig(f) | tanh(g) | sig(o)]
        i_g = act[:, 0 * H:1 * H]
        f_g = act[:, 1 * H:2 * H]
        g_g = act[:, 2 * H:3 * H]
        o_g = act[:, 3 * H:4 * H]
        c = f_g * c + i_g * g_g
        h = o_g * jnp.tanh(c)

    # Final linear head + epilogue, fused so no post-kernel XLA launches remain.
    z = (jnp.dot(h, w_proj_ref[...], preferred_element_type=jnp.float32)
         + b_proj_ref[...])                         # (B, 2E)
    mu_ref[...] = z[:, :E]
    zs = z[:, E:2 * E]
    # Numerically stable softplus built from primitive elementwise ops only.
    std_ref[...] = jnp.maximum(zs, 0.0) + jnp.log(1.0 + jnp.exp(-jnp.abs(zs)))


@functools.partial(jax.jit, static_argnames=("embedding_size",))
def encoder_seq_forward(actions, params, *, embedding_size):
    """Forward pass of EncoderSeq.

    actions: (B, T, 2) float32, batch-first (PyTorch LSTM(batch_first=True)).
    Returns ((mu, std), (q_z_params, p_z_params)); distributions as (loc, scale).
    """
    B, T, D = actions.shape            # D == 2
    E = embedding_size

    acts_flat = actions.reshape(B, T * D)          # row-major bitcast, no data movement
    w_ih = params["w_ih"]                          # (2, 4H)
    b_ih = params["b_ih"][None, :]                 # (1, 4H)
    b_hh = params["b_hh"][None, :]                 # (1, 4H)
    w_hh = params["w_hh"]                          # (H, 4H)
    w_proj = params["w_proj"]                      # (H, 2E)
    b_proj = params["b_proj"][None, :]             # (1, 2E)

    vmem = pl.BlockSpec(memory_space=pltpu.MemorySpace.VMEM)
    mu, std = pl.pallas_call(
        _encoder_seq_kernel,
        out_shape=(jax.ShapeDtypeStruct((B, E), jnp.float32),
                   jax.ShapeDtypeStruct((B, E), jnp.float32)),
        in_specs=[vmem] * 7,
        out_specs=(vmem, vmem),
    )(acts_flat, w_ih, b_ih, b_hh, w_hh, w_proj, b_proj)
    # NOTE(scaling): for production batch sizes add a batch grid axis (blocks of
    # >=128/256 rows) with dimension_semantics=("parallel",) so v7x's two
    # TensorCores split the batch, and block the inputs over T ("arbitrary") with
    # h/c held in persistent VMEM scratch if T*B outgrows v7x's 64 MiB VMEM.
    # At B=8/T=8 the single-block form avoids the ~0.35us-per-grid-step overhead.

    q_z = (mu, std)
    p_z = (jnp.zeros_like(mu), jnp.ones_like(std))
    # TODO(synk): torch.distributions.Normal has no Pallas/JAX-array equivalent;
    # distributions are returned as (loc, scale) parameter tuples instead.
    return (mu, std), (q_z, p_z)


def init_params(key, embedding_size, hidden_size):
    """PyTorch-style init: U(-1/sqrt(H), 1/sqrt(H)) for LSTM and the linear layer."""
    H, E = hidden_size, embedding_size
    k_ih, k_hh, k_bih, k_bhh, k_wp, k_bp = jax.random.split(key, 6)
    s = 1.0 / jnp.sqrt(H)
    w_ih = jax.random.uniform(k_ih, (2, 4 * H), jnp.float32, -s, s)
    w_hh = jax.random.uniform(k_hh, (H, 4 * H), jnp.float32, -s, s)
    b_ih = jax.random.uniform(k_bih, (4 * H,), jnp.float32, -s, s)
    b_hh = jax.random.uniform(k_bhh, (4 * H,), jnp.float32, -s, s)
    w_proj = jax.random.uniform(k_wp, (H, 2 * E), jnp.float32, -s, s)
    b_proj = jax.random.uniform(k_bp, (2 * E,), jnp.float32, -s, s)
    return {"w_ih": w_ih, "w_hh": w_hh, "b_ih": b_ih, "b_hh": b_hh,
            "w_proj": w_proj, "b_proj": b_proj}


def _reference_forward(actions, params, embedding_size):
    """Pure-JAX f32 reference (matches the PyTorch module's encode())."""
    B, T, _ = actions.shape
    H = params["w_hh"].shape[0]
    E = embedding_size
    b = params["b_ih"] + params["b_hh"]
    h = jnp.zeros((B, H), jnp.float32)
    c = jnp.zeros((B, H), jnp.float32)
    for t in range(T):
        gates = actions[:, t, :] @ params["w_ih"] + h @ params["w_hh"] + b
        i = jax.nn.sigmoid(gates[:, 0 * H:1 * H])
        f = jax.nn.sigmoid(gates[:, 1 * H:2 * H])
        g = jnp.tanh(gates[:, 2 * H:3 * H])
        o = jax.nn.sigmoid(gates[:, 3 * H:4 * H])
        c = f * c + i * g
        h = o * jnp.tanh(c)
    z = h @ params["w_proj"] + params["b_proj"]
    return z[:, :E], jax.nn.softplus(z[:, E:])


if __name__ == "__main__":
    # Small shapes consistent with the module: batch=8, seq=8, action dim=2,
    # hidden_size=32 (so 4H = 128 = one vreg), embedding_size=16
    # (the module's H constructor arg is unused in forward).
    B, T = 8, 8
    hidden_size = 32
    embedding_size = 16

    key = jax.random.PRNGKey(0)
    k_act, k_params = jax.random.split(key)
    actions = jax.random.normal(k_act, (B, T, 2), jnp.float32)
    params = init_params(k_params, embedding_size, hidden_size)

    (mu, std), (q_z, p_z) = encoder_seq_forward(
        actions, params, embedding_size=embedding_size)
    jax.block_until_ready((mu, std, q_z, p_z))

    assert mu.shape == (B, embedding_size)
    assert std.shape == (B, embedding_size)
    assert bool(jnp.all(std > 0.0))  # softplus output must be positive

    # All-f32 recurrence now -> tight tolerance against the pure-JAX reference
    # (only differences: tanh-based sigmoid and log(1+e) softplus formulations).
    mu_ref, std_ref = _reference_forward(actions, params, embedding_size)
    assert float(jnp.max(jnp.abs(mu - mu_ref))) < 1e-3
    assert float(jnp.max(jnp.abs(std - std_ref))) < 1e-3

    print("KERNEL_OK")
</pallas_src>

<mosaic_0001>
module attributes {stable_mosaic.version = 11 : i64} {
  func.func @_encoder_seq_kernel(%arg0: memref<8x16xf32, #tpu.memory_space<vmem>>, %arg1: memref<2x128xf32, #tpu.memory_space<vmem>>, %arg2: memref<1x128xf32, #tpu.memory_space<vmem>>, %arg3: memref<1x128xf32, #tpu.memory_space<vmem>>, %arg4: memref<32x128xf32, #tpu.memory_space<vmem>>, %arg5: memref<32x32xf32, #tpu.memory_space<vmem>>, %arg6: memref<1x32xf32, #tpu.memory_space<vmem>>, %arg7: memref<8x16xf32, #tpu.memory_space<vmem>>, %arg8: memref<8x16xf32, #tpu.memory_space<vmem>>) attributes {dimension_semantics = [], scalar_prefetch = 0 : i64, scratch_operands = 0 : i64, tpu.core_type = #tpu.core_type<tc>} {
    %0 = tpu.iota {dimensions = array<i32: 1>} : vector<8x128xi32>
    %c64_i32 = arith.constant 64 : i32
    %1 = vector.broadcast %c64_i32 : i32 to vector<8x128xi32>
    %2 = arith.cmpi sge, %0, %1 : vector<8x128xi32>
    %c96_i32 = arith.constant 96 : i32
    %3 = vector.broadcast %c96_i32 : i32 to vector<8x128xi32>
    %4 = arith.cmpi slt, %0, %3 : vector<8x128xi32>
    %5 = arith.andi %2, %4 : vector<8x128xi1>
    %cst = arith.constant 1.000000e+00 : f32
    %cst_0 = arith.constant 5.000000e-01 : f32
    %6 = vector.broadcast %cst : f32 to vector<8x128xf32>
    %7 = vector.broadcast %cst_0 : f32 to vector<8x128xf32>
    %8 = arith.select %5, %6, %7 : vector<8x128xi1>, vector<8x128xf32>
    %cst_1 = arith.constant 0.000000e+00 : f32
    %cst_2 = arith.constant 5.000000e-01 : f32
    %9 = vector.broadcast %cst_1 : f32 to vector<8x128xf32>
    %10 = vector.broadcast %cst_2 : f32 to vector<8x128xf32>
    %11 = arith.select %5, %9, %10 : vector<8x128xi1>, vector<8x128xf32>
    %c0 = arith.constant 0 : index
    %c0_3 = arith.constant 0 : index
    %12 = vector.load %arg1[%c0, %c0_3] : memref<2x128xf32, #tpu.memory_space<vmem>>, vector<1x128xf32>
    %13 = vector.shape_cast %12 : vector<1x128xf32> to vector<1x128xf32>
    %14 = vector.broadcast %13 : vector<1x128xf32> to vector<8x128xf32>
    %c1 = arith.constant 1 : index
    %c0_4 = arith.constant 0 : index
    %15 = vector.load %arg1[%c1, %c0_4] : memref<2x128xf32, #tpu.memory_space<vmem>>, vector<1x128xf32>
    %16 = vector.shape_cast %15 : vector<1x128xf32> to vector<1x128xf32>
    %17 = vector.broadcast %16 : vector<1x128xf32> to vector<8x128xf32>
    %c0_5 = arith.constant 0 : index
    %c0_6 = arith.constant 0 : index
    %18 = vector.load %arg2[%c0_5, %c0_6] : memref<1x128xf32, #tpu.memory_space<vmem>>, vector<1x128xf32>
    %c0_7 = arith.constant 0 : index
    %c0_8 = arith.constant 0 : index
    %19 = vector.load %arg3[%c0_7, %c0_8] : memref<1x128xf32, #tpu.memory_space<vmem>>, vector<1x128xf32>
    %20 = arith.addf %18, %19 : vector<1x128xf32>
    %21 = vector.shape_cast %20 : vector<1x128xf32> to vector<1x128xf32>
    %22 = vector.broadcast %21 : vector<1x128xf32> to vector<8x128xf32>
    %cst_9 = arith.constant 0.000000e+00 : f32
    %23 = vector.broadcast %cst_9 : f32 to vector<8x32xf32>
    %cst_10 = arith.constant 0.000000e+00 : f32
    %24 = vector.broadcast %cst_10 : f32 to vector<8x32xf32>
    %c0_11 = arith.constant 0 : index
    %c0_12 = arith.constant 0 : index
    %25 = vector.load %arg0[%c0_11, %c0_12] : memref<8x16xf32, #tpu.memory_space<vmem>>, vector<8x1xf32>
    %c0_13 = arith.constant 0 : index
    %c1_14 = arith.constant 1 : index
    %26 = vector.load %arg0[%c0_13, %c1_14] : memref<8x16xf32, #tpu.memory_space<vmem>>, vector<8x1xf32>
    %27 = vector.broadcast %25 : vector<8x1xf32> to vector<8x128xf32>
    %28 = arith.mulf %27, %14 : vector<8x128xf32>
    %29 = vector.broadcast %26 : vector<8x1xf32> to vector<8x128xf32>
    %30 = arith.mulf %29, %17 : vector<8x128xf32>
    %31 = arith.addf %28, %30 : vector<8x128xf32>
    %32 = arith.addf %31, %22 : vector<8x128xf32>
    %c0_15 = arith.constant 0 : index
    %c0_16 = arith.constant 0 : index
    %33 = vector.load %arg4[%c0_15, %c0_16] : memref<32x128xf32, #tpu.memory_space<vmem>>, vector<32x128xf32>
    %cst_17 = arith.constant dense<0.000000e+00> : vector<8x128xf32>
    %34 = tpu.matmul %23, %33, %cst_17 {dimension_numbers = #tpu.dot_dimension_numbers<[1], [0], [0], [1], [0, 0, 1, 1], [], []>} : vector<8x32xf32>, vector<32x128xf32>, vector<8x128xf32> -> vector<8x128xf32>
    %35 = arith.addf %32, %34 : vector<8x128xf32>
    %36 = arith.mulf %35, %8 : vector<8x128xf32>
    %37 = math.tanh %36 : vector<8x128xf32>
    %38 = arith.mulf %37, %8 : vector<8x128xf32>
    %39 = arith.addf %38, %11 : vector<8x128xf32>
    %40 = vector.extract_strided_slice %39 {offsets = [0, 0], sizes = [8, 32], strides = [1, 1]} : vector<8x128xf32> to vector<8x32xf32>
    %41 = vector.extract_strided_slice %39 {offsets = [0, 32], sizes = [8, 32], strides = [1, 1]} : vector<8x128xf32> to vector<8x32xf32>
    %42 = vector.extract_strided_slice %39 {offsets = [0, 64], sizes = [8, 32], strides = [1, 1]} : vector<8x128xf32> to vector<8x32xf32>
    %43 = vector.extract_strided_slice %39 {offsets = [0, 96], sizes = [8, 32], strides = [1, 1]} : vector<8x128xf32> to vector<8x32xf32>
    %44 = arith.mulf %41, %24 : vector<8x32xf32>
    %45 = arith.mulf %40, %42 : vector<8x32xf32>
    %46 = arith.addf %44, %45 : vector<8x32xf32>
    %47 = math.tanh %46 : vector<8x32xf32>
    %48 = arith.mulf %43, %47 : vector<8x32xf32>
    %c0_18 = arith.constant 0 : index
    %c2 = arith.constant 2 : index
    %49 = vector.load %arg0[%c0_18, %c2] : memref<8x16xf32, #tpu.memory_space<vmem>>, vector<8x1xf32>
    %c0_19 = arith.constant 0 : index
    %c3 = arith.constant 3 : index
    %50 = vector.load %arg0[%c0_19, %c3] : memref<8x16xf32, #tpu.memory_space<vmem>>, vector<8x1xf32>
    %51 = vector.broadcast %49 : vector<8x1xf32> to vector<8x128xf32>
    %52 = arith.mulf %51, %14 : vector<8x128xf32>
    %53 = vector.broadcast %50 : vector<8x1xf32> to vector<8x128xf32>
    %54 = arith.mulf %53, %17 : vector<8x128xf32>
    %55 = arith.addf %52, %54 : vector<8x128xf32>
    %56 = arith.addf %55, %22 : vector<8x128xf32>
    %c0_20 = arith.constant 0 : index
    %c0_21 = arith.constant 0 : index
    %57 = vector.load %arg4[%c0_20, %c0_21] : memref<32x128xf32, #tpu.memory_space<vmem>>, vector<32x128xf32>
    %cst_22 = arith.constant dense<0.000000e+00> : vector<8x128xf32>
    %58 = tpu.matmul %48, %57, %cst_22 {dimension_numbers = #tpu.dot_dimension_numbers<[1], [0], [0], [1], [0, 0, 1, 1], [], []>} : vector<8x32xf32>, vector<32x128xf32>, vector<8x128xf32> -> vector<8x128xf32>
    %59 = arith.addf %56, %58 : vector<8x128xf32>
    %60 = arith.mulf %59, %8 : vector<8x128xf32>
    %61 = math.tanh %60 : vector<8x128xf32>
    %62 = arith.mulf %61, %8 : vector<8x128xf32>
    %63 = arith.addf %62, %11 : vector<8x128xf32>
    %64 = vector.extract_strided_slice %63 {offsets = [0, 0], sizes = [8, 32], strides = [1, 1]} : vector<8x128xf32> to vector<8x32xf32>
    %65 = vector.extract_strided_slice %63 {offsets = [0, 32], sizes = [8, 32], strides = [1, 1]} : vector<8x128xf32> to vector<8x32xf32>
    %66 = vector.extract_strided_slice %63 {offsets = [0, 64], sizes = [8, 32], strides = [1, 1]} : vector<8x128xf32> to vector<8x32xf32>
    %67 = vector.extract_strided_slice %63 {offsets = [0, 96], sizes = [8, 32], strides = [1, 1]} : vector<8x128xf32> to vector<8x32xf32>
    %68 = arith.mulf %65, %46 : vector<8x32xf32>
    %69 = arith.mulf %64, %66 : vector<8x32xf32>
    %70 = arith.addf %68, %69 : vector<8x32xf32>
    %71 = math.tanh %70 : vector<8x32xf32>
    %72 = arith.mulf %67, %71 : vector<8x32xf32>
    %c0_23 = arith.constant 0 : index
    %c4 = arith.constant 4 : index
    %73 = vector.load %arg0[%c0_23, %c4] : memref<8x16xf32, #tpu.memory_space<vmem>>, vector<8x1xf32>
    %c0_24 = arith.constant 0 : index
    %c5 = arith.constant 5 : index
    %74 = vector.load %arg0[%c0_24, %c5] : memref<8x16xf32, #tpu.memory_space<vmem>>, vector<8x1xf32>
    %75 = vector.broadcast %73 : vector<8x1xf32> to vector<8x128xf32>
    %76 = arith.mulf %75, %14 : vector<8x128xf32>
    %77 = vector.broadcast %74 : vector<8x1xf32> to vector<8x128xf32>
    %78 = arith.mulf %77, %17 : vector<8x128xf32>
    %79 = arith.addf %76, %78 : vector<8x128xf32>
    %80 = arith.addf %79, %22 : vector<8x128xf32>
    %c0_25 = arith.constant 0 : index
    %c0_26 = arith.constant 0 : index
    %81 = vector.load %arg4[%c0_25, %c0_26] : memref<32x128xf32, #tpu.memory_space<vmem>>, vector<32x128xf32>
    %cst_27 = arith.constant dense<0.000000e+00> : vector<8x128xf32>
    %82 = tpu.matmul %72, %81, %cst_27 {dimension_numbers = #tpu.dot_dimension_numbers<[1], [0], [0], [1], [0, 0, 1, 1], [], []>} : vector<8x32xf32>, vector<32x128xf32>, vector<8x128xf32> -> vector<8x128xf32>
    %83 = arith.addf %80, %82 : vector<8x128xf32>
    %84 = arith.mulf %83, %8 : vector<8x128xf32>
    %85 = math.tanh %84 : vector<8x128xf32>
    %86 = arith.mulf %85, %8 : vector<8x128xf32>
    %87 = arith.addf %86, %11 : vector<8x128xf32>
    %88 = vector.extract_strided_slice %87 {offsets = [0, 0], sizes = [8, 32], strides = [1, 1]} : vector<8x128xf32> to vector<8x32xf32>
    %89 = vector.extract_strided_slice %87 {offsets = [0, 32], sizes = [8, 32], strides = [1, 1]} : vector<8x128xf32> to vector<8x32xf32>
    %90 = vector.extract_strided_slice %87 {offsets = [0, 64], sizes = [8, 32], strides = [1, 1]} : vector<8x128xf32> to vector<8x32xf32>
    %91 = vector.extract_strided_slice %87 {offsets = [0, 96], sizes = [8, 32], strides = [1, 1]} : vector<8x128xf32> to vector<8x32xf32>
    %92 = arith.mulf %89, %70 : vector<8x32xf32>
    %93 = arith.mulf %88, %90 : vector<8x32xf32>
    %94 = arith.addf %92, %93 : vector<8x32xf32>
    %95 = math.tanh %94 : vector<8x32xf32>
    %96 = arith.mulf %91, %95 : vector<8x32xf32>
    %c0_28 = arith.constant 0 : index
    %c6 = arith.constant 6 : index
    %97 = vector.load %arg0[%c0_28, %c6] : memref<8x16xf32, #tpu.memory_space<vmem>>, vector<8x1xf32>
    %c0_29 = arith.constant 0 : index
    %c7 = arith.constant 7 : index
    %98 = vector.load %arg0[%c0_29, %c7] : memref<8x16xf32, #tpu.memory_space<vmem>>, vector<8x1xf32>
    %99 = vector.broadcast %97 : vector<8x1xf32> to vector<8x128xf32>
    %100 = arith.mulf %99, %14 : vector<8x128xf32>
    %101 = vector.broadcast %98 : vector<8x1xf32> to vector<8x128xf32>
    %102 = arith.mulf %101, %17 : vector<8x128xf32>
    %103 = arith.addf %100, %102 : vector<8x128xf32>
    %104 = arith.addf %103, %22 : vector<8x128xf32>
    %c0_30 = arith.constant 0 : index
    %c0_31 = arith.constant 0 : index
    %105 = vector.load %arg4[%c0_30, %c0_31] : memref<32x128xf32, #tpu.memory_space<vmem>>, vector<32x128xf32>
    %cst_32 = arith.constant dense<0.000000e+00> : vector<8x128xf32>
    %106 = tpu.matmul %96, %105, %cst_32 {dimension_numbers = #tpu.dot_dimension_numbers<[1], [0], [0], [1], [0, 0, 1, 1], [], []>} : vector<8x32xf32>, vector<32x128xf32>, vector<8x128xf32> -> vector<8x128xf32>
    %107 = arith.addf %104, %106 : vector<8x128xf32>
    %108 = arith.mulf %107, %8 : vector<8x128xf32>
    %109 = math.tanh %108 : vector<8x128xf32>
    %110 = arith.mulf %109, %8 : vector<8x128xf32>
    %111 = arith.addf %110, %11 : vector<8x128xf32>
    %112 = vector.extract_strided_slice %111 {offsets = [0, 0], sizes = [8, 32], strides = [1, 1]} : vector<8x128xf32> to vector<8x32xf32>
    %113 = vector.extract_strided_slice %111 {offsets = [0, 32], sizes = [8, 32], strides = [1, 1]} : vector<8x128xf32> to vector<8x32xf32>
    %114 = vector.extract_strided_slice %111 {offsets = [0, 64], sizes = [8, 32], strides = [1, 1]} : vector<8x128xf32> to vector<8x32xf32>
    %115 = vector.extract_strided_slice %111 {offsets = [0, 96], sizes = [8, 32], strides = [1, 1]} : vector<8x128xf32> to vector<8x32xf32>
    %116 = arith.mulf %113, %94 : vector<8x32xf32>
    %117 = arith.mulf %112, %114 : vector<8x32xf32>
    %118 = arith.addf %116, %117 : vector<8x32xf32>
    %119 = math.tanh %118 : vector<8x32xf32>
    %120 = arith.mulf %115, %119 : vector<8x32xf32>
    %c0_33 = arith.constant 0 : index
    %c8 = arith.constant 8 : index
    %121 = vector.load %arg0[%c0_33, %c8] : memref<8x16xf32, #tpu.memory_space<vmem>>, vector<8x1xf32>
    %c0_34 = arith.constant 0 : index
    %c9 = arith.constant 9 : index
    %122 = vector.load %arg0[%c0_34, %c9] : memref<8x16xf32, #tpu.memory_space<vmem>>, vector<8x1xf32>
    %123 = vector.broadcast %121 : vector<8x1xf32> to vector<8x128xf32>
    %124 = arith.mulf %123, %14 : vector<8x128xf32>
    %125 = vector.broadcast %122 : vector<8x1xf32> to vector<8x128xf32>
    %126 = arith.mulf %125, %17 : vector<8x128xf32>
    %127 = arith.addf %124, %126 : vector<8x128xf32>
    %128 = arith.addf %127, %22 : vector<8x128xf32>
    %c0_35 = arith.constant 0 : index
    %c0_36 = arith.constant 0 : index
    %129 = vector.load %arg4[%c0_35, %c0_36] : memref<32x128xf32, #tpu.memory_space<vmem>>, vector<32x128xf32>
    %cst_37 = arith.constant dense<0.000000e+00> : vector<8x128xf32>
    %130 = tpu.matmul %120, %129, %cst_37 {dimension_numbers = #tpu.dot_dimension_numbers<[1], [0], [0], [1], [0, 0, 1, 1], [], []>} : vector<8x32xf32>, vector<32x128xf32>, vector<8x128xf32> -> vector<8x128xf32>
    %131 = arith.addf %128, %130 : vector<8x128xf32>
    %132 = arith.mulf %131, %8 : vector<8x128xf32>
    %133 = math.tanh %132 : vector<8x128xf32>
    %134 = arith.mulf %133, %8 : vector<8x128xf32>
    %135 = arith.addf %134, %11 : vector<8x128xf32>
    %136 = vector.extract_strided_slice %135 {offsets = [0, 0], sizes = [8, 32], strides = [1, 1]} : vector<8x128xf32> to vector<8x32xf32>
    %137 = vector.extract_strided_slice %135 {offsets = [0, 32], sizes = [8, 32], strides = [1, 1]} : vector<8x128xf32> to vector<8x32xf32>
    %138 = vector.extract_strided_slice %135 {offsets = [0, 64], sizes = [8, 32], strides = [1, 1]} : vector<8x128xf32> to vector<8x32xf32>
    %139 = vector.extract_strided_slice %135 {offsets = [0, 96], sizes = [8, 32], strides = [1, 1]} : vector<8x128xf32> to vector<8x32xf32>
    %140 = arith.mulf %137, %118 : vector<8x32xf32>
    %141 = arith.mulf %136, %138 : vector<8x32xf32>
    %142 = arith.addf %140, %141 : vector<8x32xf32>
    %143 = math.tanh %142 : vector<8x32xf32>
    %144 = arith.mulf %139, %143 : vector<8x32xf32>
    %c0_38 = arith.constant 0 : index
    %c10 = arith.constant 10 : index
    %145 = vector.load %arg0[%c0_38, %c10] : memref<8x16xf32, #tpu.memory_space<vmem>>, vector<8x1xf32>
    %c0_39 = arith.constant 0 : index
    %c11 = arith.constant 11 : index
    %146 = vector.load %arg0[%c0_39, %c11] : memref<8x16xf32, #tpu.memory_space<vmem>>, vector<8x1xf32>
    %147 = vector.broadcast %145 : vector<8x1xf32> to vector<8x128xf32>
    %148 = arith.mulf %147, %14 : vector<8x128xf32>
    %149 = vector.broadcast %146 : vector<8x1xf32> to vector<8x128xf32>
    %150 = arith.mulf %149, %17 : vector<8x128xf32>
    %151 = arith.addf %148, %150 : vector<8x128xf32>
    %152 = arith.addf %151, %22 : vector<8x128xf32>
    %c0_40 = arith.constant 0 : index
    %c0_41 = arith.constant 0 : index
    %153 = vector.load %arg4[%c0_40, %c0_41] : memref<32x128xf32, #tpu.memory_space<vmem>>, vector<32x128xf32>
    %cst_42 = arith.constant dense<0.000000e+00> : vector<8x128xf32>
    %154 = tpu.matmul %144, %153, %cst_42 {dimension_numbers = #tpu.dot_dimension_numbers<[1], [0], [0], [1], [0, 0, 1, 1], [], []>} : vector<8x32xf32>, vector<32x128xf32>, vector<8x128xf32> -> vector<8x128xf32>
    %155 = arith.addf %152, %154 : vector<8x128xf32>
    %156 = arith.mulf %155, %8 : vector<8x128xf32>
    %157 = math.tanh %156 : vector<8x128xf32>
    %158 = arith.mulf %157, %8 : vector<8x128xf32>
    %159 = arith.addf %158, %11 : vector<8x128xf32>
    %160 = vector.extract_strided_slice %159 {offsets = [0, 0], sizes = [8, 32], strides = [1, 1]} : vector<8x128xf32> to vector<8x32xf32>
    %161 = vector.extract_strided_slice %159 {offsets = [0, 32], sizes = [8, 32], strides = [1, 1]} : vector<8x128xf32> to vector<8x32xf32>
    %162 = vector.extract_strided_slice %159 {offsets = [0, 64], sizes = [8, 32], strides = [1, 1]} : vector<8x128xf32> to vector<8x32xf32>
    %163 = vector.extract_strided_slice %159 {offsets = [0, 96], sizes = [8, 32], strides = [1, 1]} : vector<8x128xf32> to vector<8x32xf32>
    %164 = arith.mulf %161, %142 : vector<8x32xf32>
    %165 = arith.mulf %160, %162 : vector<8x32xf32>
    %166 = arith.addf %164, %165 : vector<8x32xf32>
    %167 = math.tanh %166 : vector<8x32xf32>
    %168 = arith.mulf %163, %167 : vector<8x32xf32>
    %c0_43 = arith.constant 0 : index
    %c12 = arith.constant 12 : index
    %169 = vector.load %arg0[%c0_43, %c12] : memref<8x16xf32, #tpu.memory_space<vmem>>, vector<8x1xf32>
    %c0_44 = arith.constant 0 : index
    %c13 = arith.constant 13 : index
    %170 = vector.load %arg0[%c0_44, %c13] : memref<8x16xf32, #tpu.memory_space<vmem>>, vector<8x1xf32>
    %171 = vector.broadcast %169 : vector<8x1xf32> to vector<8x128xf32>
    %172 = arith.mulf %171, %14 : vector<8x128xf32>
    %173 = vector.broadcast %170 : vector<8x1xf32> to vector<8x128xf32>
    %174 = arith.mulf %173, %17 : vector<8x128xf32>
    %175 = arith.addf %172, %174 : vector<8x128xf32>
    %176 = arith.addf %175, %22 : vector<8x128xf32>
    %c0_45 = arith.constant 0 : index
    %c0_46 = arith.constant 0 : index
    %177 = vector.load %arg4[%c0_45, %c0_46] : memref<32x128xf32, #tpu.memory_space<vmem>>, vector<32x128xf32>
    %cst_47 = arith.constant dense<0.000000e+00> : vector<8x128xf32>
    %178 = tpu.matmul %168, %177, %cst_47 {dimension_numbers = #tpu.dot_dimension_numbers<[1], [0], [0], [1], [0, 0, 1, 1], [], []>} : vector<8x32xf32>, vector<32x128xf32>, vector<8x128xf32> -> vector<8x128xf32>
    %179 = arith.addf %176, %178 : vector<8x128xf32>
    %180 = arith.mulf %179, %8 : vector<8x128xf32>
    %181 = math.tanh %180 : vector<8x128xf32>
    %182 = arith.mulf %181, %8 : vector<8x128xf32>
    %183 = arith.addf %182, %11 : vector<8x128xf32>
    %184 = vector.extract_strided_slice %183 {offsets = [0, 0], sizes = [8, 32], strides = [1, 1]} : vector<8x128xf32> to vector<8x32xf32>
    %185 = vector.extract_strided_slice %183 {offsets = [0, 32], sizes = [8, 32], strides = [1, 1]} : vector<8x128xf32> to vector<8x32xf32>
    %186 = vector.extract_strided_slice %183 {offsets = [0, 64], sizes = [8, 32], strides = [1, 1]} : vector<8x128xf32> to vector<8x32xf32>
    %187 = vector.extract_strided_slice %183 {offsets = [0, 96], sizes = [8, 32], strides = [1, 1]} : vector<8x128xf32> to vector<8x32xf32>
    %188 = arith.mulf %185, %166 : vector<8x32xf32>
    %189 = arith.mulf %184, %186 : vector<8x32xf32>
    %190 = arith.addf %188, %189 : vector<8x32xf32>
    %191 = math.tanh %190 : vector<8x32xf32>
    %192 = arith.mulf %187, %191 : vector<8x32xf32>
    %c0_48 = arith.constant 0 : index
    %c14 = arith.constant 14 : index
    %193 = vector.load %arg0[%c0_48, %c14] : memref<8x16xf32, #tpu.memory_space<vmem>>, vector<8x1xf32>
    %c0_49 = arith.constant 0 : index
    %c15 = arith.constant 15 : index
    %194 = vector.load %arg0[%c0_49, %c15] : memref<8x16xf32, #tpu.memory_space<vmem>>, vector<8x1xf32>
    %195 = vector.broadcast %193 : vector<8x1xf32> to vector<8x128xf32>
    %196 = arith.mulf %195, %14 : vector<8x128xf32>
    %197 = vector.broadcast %194 : vector<8x1xf32> to vector<8x128xf32>
    %198 = arith.mulf %197, %17 : vector<8x128xf32>
    %199 = arith.addf %196, %198 : vector<8x128xf32>
    %200 = arith.addf %199, %22 : vector<8x128xf32>
    %c0_50 = arith.constant 0 : index
    %c0_51 = arith.constant 0 : index
    %201 = vector.load %arg4[%c0_50, %c0_51] : memref<32x128xf32, #tpu.memory_space<vmem>>, vector<32x128xf32>
    %cst_52 = arith.constant dense<0.000000e+00> : vector<8x128xf32>
    %202 = tpu.matmul %192, %201, %cst_52 {dimension_numbers = #tpu.dot_dimension_numbers<[1], [0], [0], [1], [0, 0, 1, 1], [], []>} : vector<8x32xf32>, vector<32x128xf32>, vector<8x128xf32> -> vector<8x128xf32>
    %203 = arith.addf %200, %202 : vector<8x128xf32>
    %204 = arith.mulf %203, %8 : vector<8x128xf32>
    %205 = math.tanh %204 : vector<8x128xf32>
    %206 = arith.mulf %205, %8 : vector<8x128xf32>
    %207 = arith.addf %206, %11 : vector<8x128xf32>
    %208 = vector.extract_strided_slice %207 {offsets = [0, 0], sizes = [8, 32], strides = [1, 1]} : vector<8x128xf32> to vector<8x32xf32>
    %209 = vector.extract_strided_slice %207 {offsets = [0, 32], sizes = [8, 32], strides = [1, 1]} : vector<8x128xf32> to vector<8x32xf32>
    %210 = vector.extract_strided_slice %207 {offsets = [0, 64], sizes = [8, 32], strides = [1, 1]} : vector<8x128xf32> to vector<8x32xf32>
    %211 = vector.extract_strided_slice %207 {offsets = [0, 96], sizes = [8, 32], strides = [1, 1]} : vector<8x128xf32> to vector<8x32xf32>
    %212 = arith.mulf %209, %190 : vector<8x32xf32>
    %213 = arith.mulf %208, %210 : vector<8x32xf32>
    %214 = arith.addf %212, %213 : vector<8x32xf32>
    %215 = math.tanh %214 : vector<8x32xf32>
    %216 = arith.mulf %211, %215 : vector<8x32xf32>
    %c0_53 = arith.constant 0 : index
    %c0_54 = arith.constant 0 : index
    %217 = vector.load %arg5[%c0_53, %c0_54] : memref<32x32xf32, #tpu.memory_space<vmem>>, vector<32x32xf32>
    %cst_55 = arith.constant dense<0.000000e+00> : vector<8x32xf32>
    %218 = tpu.matmul %216, %217, %cst_55 {dimension_numbers = #tpu.dot_dimension_numbers<[1], [0], [0], [1], [0, 0, 1, 1], [], []>} : vector<8x32xf32>, vector<32x32xf32>, vector<8x32xf32> -> vector<8x32xf32>
    %c0_56 = arith.constant 0 : index
    %c0_57 = arith.constant 0 : index
    %219 = vector.load %arg6[%c0_56, %c0_57] : memref<1x32xf32, #tpu.memory_space<vmem>>, vector<1x32xf32>
    %220 = vector.broadcast %219 : vector<1x32xf32> to vector<8x32xf32>
    %221 = arith.addf %218, %220 : vector<8x32xf32>
    %222 = vector.extract_strided_slice %221 {offsets = [0, 0], sizes = [8, 16], strides = [1, 1]} : vector<8x32xf32> to vector<8x16xf32>
    %c0_58 = arith.constant 0 : index
    %c0_59 = arith.constant 0 : index
    %223 = vector.load %arg7[%c0_58, %c0_59] : memref<8x16xf32, #tpu.memory_space<vmem>>, vector<8x16xf32>
    tpu.vector_store %arg7[%c0_58, %c0_59], %222 {strides = array<i32>} : memref<8x16xf32, #tpu.memory_space<vmem>>, vector<8x16xf32>,
    %224 = vector.extract_strided_slice %221 {offsets = [0, 16], sizes = [8, 16], strides = [1, 1]} : vector<8x32xf32> to vector<8x16xf32>
    %cst_60 = arith.constant 0.000000e+00 : f32
    %225 = vector.broadcast %cst_60 : f32 to vector<8x16xf32>
    %226 = arith.maximumf %224, %225 : vector<8x16xf32>
    %227 = math.absf %224 : vector<8x16xf32>
    %cst_61 = arith.constant 0.000000e+00 : f32
    %228 = vector.broadcast %cst_61 : f32 to vector<8x16xf32>
    %229 = arith.subf %228, %227 : vector<8x16xf32>
    %230 = math.exp %229 : vector<8x16xf32>
    %cst_62 = arith.constant 1.000000e+00 : f32
    %231 = vector.broadcast %cst_62 : f32 to vector<8x16xf32>
    %232 = arith.addf %231, %230 : vector<8x16xf32>
    %233 = math.log %232 : vector<8x16xf32>
    %234 = arith.addf %226, %233 : vector<8x16xf32>
    %c0_63 = arith.constant 0 : index
    %c0_64 = arith.constant 0 : index
    %235 = vector.load %arg8[%c0_63, %c0_64] : memref<8x16xf32, #tpu.memory_space<vmem>>, vector<8x16xf32>
    tpu.vector_store %arg8[%c0_63, %c0_64], %234 {strides = array<i32>} : memref<8x16xf32, #tpu.memory_space<vmem>>, vector<8x16xf32>,
    return
  }
}

</mosaic_0001>

<llo_original>
// kernel: encoder_seq_forward.1
$region0: #{encoder_seq_forward.1}
  #allocation0 [shape = 'u32[]', space=smem, size = 0x4, offset = 0x4, fixed_abs, tag = 'smem constant byte address 0x4 - core index']
  #allocation1 [shape = 'u32[144,128]{1,0:T(1,128)}', space=vmem, size = 0x12000, scoped, tag = 'internal scratch']
  %s0 = inlined_call_operand.vmem [shape: f32[8,16], index: 0, kind: input, shape index: {}]
  %s1 = inlined_call_operand.vmem [shape: f32[2,128], index: 1, kind: input, shape index: {}]
  %s2 = inlined_call_operand.hbm [shape: f32[1,128], index: 2, kind: input, shape index: {}]
  %s3 = inlined_call_operand.hbm [shape: f32[1,128], index: 3, kind: input, shape index: {}]
  %s4 = inlined_call_operand.vmem [shape: f32[32,128], index: 4, kind: input, shape index: {}]
  %s5 = inlined_call_operand.vmem [shape: f32[32,32], index: 5, kind: input, shape index: {}]
  %s6 = inlined_call_operand.vmem [shape: f32[1,32], index: 6, kind: input, shape index: {}]
  %s7 = inlined_call_operand.vmem [shape: f32[8,16], index: 7, kind: output, shape index: {0}]
  %s8 = inlined_call_operand.vmem [shape: f32[8,16], index: 8, kind: output, shape index: {1}]
  %9 = xla_tuple %s7, %s8
  %s10 = sld [smem:[#allocation0]]
  $region54: #{encoder_seq_forward.1} parent=0
    _
  %s12 = ssub.s32 1, %s10
  %s13 = scalar_select 0, %s12, %s10
  $region1: #{encoder_seq_forward.1} parent=0
    #allocation2 [shape = 'u8[512]{0}', space=vmem, size = 0x400, scoped, tag = 'input window, operand 2, single buffered']
    #allocation3 [shape = 's32[1]{0}', space=sflag, size = 0x4, scoped, tag = 'scoped memory for encoder_seq_forward.1']
    #allocation4 [shape = 'u8[512]{0}', space=vmem, size = 0x400, scoped, tag = 'input window, operand 3, single buffered']
    #allocation5 [shape = 's32[1]{0}', space=sflag, size = 0x4, scoped, tag = 'scoped memory for encoder_seq_forward.1']
    %14 = vsyncpa [#allocation3], 0
    %15 = vsyncpa [#allocation5], 0
    // Predicated region
    $region2: #{encoder_seq_forward.1} parent=1 // pred_check
      _
    $region3: #{encoder_seq_forward.1} parent=1 // pred_check_branch
      %17 = sbr.rel (0) target = $region5
    $region4: #{encoder_seq_forward.1} parent=1 // pred_region
      _
    $region5: #{encoder_seq_forward.1} parent=1 // pred_fallthru
      _
    // Predicated region
    $region6: #{encoder_seq_forward.1} parent=1 // pred_check
      _
    $region7: #{encoder_seq_forward.1} parent=1 // pred_check_branch
      %19 = sbr.rel (0) target = $region9
    $region8: #{encoder_seq_forward.1} parent=1 // pred_region
      _
    $region9: #{encoder_seq_forward.1} parent=1 // pred_fallthru
      _
    // Predicated region
    $region10: #{encoder_seq_forward.1} parent=1 // pred_check
      _
    $region11: #{encoder_seq_forward.1} parent=1 // pred_check_branch
      %21 = sbr.rel (0) target = $region13
    $region12: #{encoder_seq_forward.1} parent=1 // pred_region
      %s23 = ssub.s32 16, 16
      %24 = vsyncadd [#allocation3], %s23
      %s26 = sshll.u32 [#allocation2], 4
      %s27 = int_to_ptr.vmem [resolvable:$true] %s26
      %29 = dma.hbm_to_vmem [thread:$0]  %s2, 16, %s27, [#allocation3]
    $region13: #{encoder_seq_forward.1} parent=1 // pred_fallthru
      _
    // Predicated region
    $region14: #{encoder_seq_forward.1} parent=1 // pred_check
      _
    $region15: #{encoder_seq_forward.1} parent=1 // pred_check_branch
      %31 = sbr.rel (0) target = $region17
    $region16: #{encoder_seq_forward.1} parent=1 // pred_region
      %s33 = ssub.s32 16, 16
      %34 = vsyncadd [#allocation5], %s33
      %s36 = sshll.u32 [#allocation4], 4
      %s37 = int_to_ptr.vmem [resolvable:$true] %s36
      %39 = dma.hbm_to_vmem [thread:$0]  %s3, 16, %s37, [#allocation5]
    $region17: #{encoder_seq_forward.1} parent=1 // pred_fallthru
      _
    // Predicated region
    $region18: #{encoder_seq_forward.1} parent=1 // pred_check
      _
    $region19: #{encoder_seq_forward.1} parent=1 // pred_check_branch
      %41 = sbr.rel (0) target = $region21
    $region20: #{encoder_seq_forward.1} parent=1 // pred_region
      _
    $region21: #{encoder_seq_forward.1} parent=1 // pred_fallthru
      _
    // Predicated region
    $region22: #{encoder_seq_forward.1} parent=1 // pred_check
      _
    $region23: #{encoder_seq_forward.1} parent=1 // pred_check_branch
      %43 = sbr.rel (0) target = $region25
    $region24: #{encoder_seq_forward.1} parent=1 // pred_region
      _
    $region25: #{encoder_seq_forward.1} parent=1 // pred_fallthru
      _
    // Predicated region
    $region26: #{encoder_seq_forward.1} parent=1 // pred_check
      _
    $region27: #{encoder_seq_forward.1} parent=1 // pred_check_branch
      %45 = sbr.rel (0) target = $region29
    $region28: #{encoder_seq_forward.1} parent=1 // pred_region
      _
    $region29: #{encoder_seq_forward.1} parent=1 // pred_fallthru
      _
    // Predicated region
    $region30: #{encoder_seq_forward.1} parent=1 // pred_check
      _
    $region31: #{encoder_seq_forward.1} parent=1 // pred_check_branch
      %47 = sbr.rel (0) target = $region33
    $region32: #{encoder_seq_forward.1} parent=1 // pred_region
      %48 = dma.done [#allocation3], 16
    $region33: #{encoder_seq_forward.1} parent=1 // pred_fallthru
      _
    // Predicated region
    $region34: #{encoder_seq_forward.1} parent=1 // pred_check
      _
    $region35: #{encoder_seq_forward.1} parent=1 // pred_check_branch
      %50 = sbr.rel (0) target = $region37
    $region36: #{encoder_seq_forward.1} parent=1 // pred_region
      %51 = dma.done [#allocation5], 16
    $region37: #{encoder_seq_forward.1} parent=1 // pred_fallthru
      _
    %v52 = vlaneseq
    %v53 = vand.u32 %v52, 127
    %vm54 = vcmp.ge.s32.totalorder %v53, 64
    %vm55 = vcmp.lt.s32.totalorder %v53, 96
    %vm56 = vmand %vm54, %vm55
    %v57 = vsel %vm56, 1.0, 0.5
    %v58 = vsel %vm56, 0.0, 0.5
    %v59 = vld [vmem:[%s1] sm:$0x1]
    %v60 = vlaneseq
    %v61 = vshrl.u32 %v60, 7
    %v62 = vsub.s32 0, %v61
    %v63 = vrot.slane %v59, %v62
    %v64 = vld [vmem:[%s1 + $0x1] sm:$0x1]
    %v65 = vlaneseq
    %v66 = vshrl.u32 %v65, 7
    %v67 = vsub.s32 0, %v66
    %v68 = vrot.slane %v64, %v67
    %v69 = vld [vmem:[#allocation2] sm:$0x1]
    %v70 = vld [vmem:[#allocation4] sm:$0x1]
    %v71 = vadd.f32 %v69, %v70
    %v73 = vlaneseq
    %v74 = vshrl.u32 %v73, 7
    %v75 = vsub.s32 0, %v74
    %v76 = vrot.slane %v71, %v75
    %v78 = vld [vmem:[%s0] sm:$0xff]
    %80 = vset.pattern.permute.xlu0 0
    %81 = vperm.xlu0 %80, %v78
    %v82 = vpop.permute.xlu0 %81
    %v84 = vmul.f32 %v82, %v63
    %85 = vset.pattern.permute.xlu0 1
    %86 = vperm.xlu0 %85, %v78
    %v87 = vpop.permute.xlu0 %86
    %v89 = vmul.f32 %v87, %v68
    %v90 = vadd.f32 %v84, %v89
    %v91 = vadd.f32 %v90, %v76
    %v92 = vld [vmem:[%s4] sm:$0xff]
    %v93 = vld [vmem:[%s4 + $0x8] sm:$0xff]
    %v94 = vld [vmem:[%s4 + $0x10] sm:$0xff]
    %v95 = vld [vmem:[%s4 + $0x18] sm:$0xff]
    %vm96 = vcmask 261120
    %v98 = vsel %vm96, 0.0, 0
    %100 = vmatprep.subr.mxu0 0.0
    %101 = vmatpush1.msra.mxu0 0.0
    %102 = vmatprep.subr.mxu0 0.0
    %103 = vmatpush1.msra.mxu0 0.0
    %104 = vmatprep.subr.mxu0 0.0
    %105 = vmatpush1.msra.mxu0 0.0
    %106 = vmatprep.subr.mxu0 0.0
    %107 = vmatpush1.msra.mxu0 0.0
    %108 = vmatprep.subr.mxu0 0.0
    %109 = vmatpush1.msra.mxu0 0.0
    %110 = vmatprep.subr.mxu0 0.0
    %111 = vmatpush1.msra.mxu0 0.0
    %112 = vmatprep.subr.mxu0 0.0
    %113 = vmatpush1.msra.mxu0 0.0
    %114 = vmatprep.subr.mxu0 0.0
    %115 = vmatpush1.msra.mxu0 0.0
    %116 = vmatprep.subr.mxu0 0.0
    %117 = vmatpush1.msra.mxu0 0.0
    %118 = vmatprep.subr.mxu0 0.0
    %119 = vmatpush1.msra.mxu0 0.0
    %120 = vmatprep.subr.mxu0 0.0
    %121 = vmatpush1.msra.mxu0 0.0
    %122 = vmatprep.subr.mxu0 0.0
    %123 = vmatpush1.msra.mxu0 0.0
    %124 = vmatprep.subr.mxu0 0.0
    %125 = vmatpush1.msra.mxu0 %v95
    %126 = vmatprep.subr.mxu0 0.0
    %127 = vmatpush1.msra.mxu0 %v94
    %128 = vmatprep.subr.mxu0 0.0
    %129 = vmatpush1.msra.mxu0 %v93
    %130 = vmatprep.subr.mxu0 0.0
    %131 = vmatpush1.msra.mxu0 %v92
    %132 = vmatprep.subr.mxu0 0.0
    %133 = vmatpush2.msra.mxu0 0.0
    %134 = vmatprep.subr.mxu0 0.0
    %135 = vmatpush2.msra.mxu0 0.0
    %136 = vmatprep.subr.mxu0 0.0
    %137 = vmatpush2.msra.mxu0 0.0
    %138 = vmatprep.subr.mxu0 0.0
    %139 = vmatpush2.msra.mxu0 0.0
    %140 = vmatprep.subr.mxu0 0.0
    %141 = vmatpush2.msra.mxu0 0.0
    %142 = vmatprep.subr.mxu0 0.0
    %143 = vmatpush2.msra.mxu0 0.0
    %144 = vmatprep.subr.mxu0 0.0
    %145 = vmatpush2.msra.mxu0 0.0
    %146 = vmatprep.subr.mxu0 0.0
    %147 = vmatpush2.msra.mxu0 0.0
    %148 = vmatprep.subr.mxu0 0.0
    %149 = vmatpush2.msra.mxu0 0.0
    %150 = vmatprep.subr.mxu0 0.0
    %151 = vmatpush2.msra.mxu0 0.0
    %152 = vmatprep.subr.mxu0 0.0
    %153 = vmatpush2.msra.mxu0 0.0
    %154 = vmatprep.subr.mxu0 0.0
    %155 = vmatpush2.msra.mxu0 0.0
    %156 = vmatprep.subr.mxu0 0.0
    %157 = vmatpush2.msra.mxu0 0.0
    %158 = vmatprep.subr.mxu0 0.0
    %159 = vmatpush2.msra.mxu0 0.0
    %160 = vmatprep.subr.mxu0 0.0
    %161 = vmatpush2.msra.mxu0 0.0
    %162 = vmatprep.subr.mxu0 0.0
    %163 = vmatpush2.msra.mxu0 0.0
    %164 = vmatprep.mubr.f32.mxu0 0.0
    %165 = vmatmul.mubr.f32.gmra.mxu0 %v98
    %v166 = vpop.f32.mrf.mxu0
    %v167 = vadd.f32 0.0, %v166
    %v168 = vpop.f32.mrf.mxu0
    %169 = vdwg.mxu0
    %v170 = vadd.f32 %v91, %v167
    %v171 = vmul.f32 %v170, %v57
    %v172 = vtanh.pop %v171
    %v173 = vmul.f32 %v172, %v57
    %v174 = vadd.f32 %v173, %v58
    %v175 = vmul.f32 %v174, 0.0
    %177 = vrot.lane.b32.xlu0 %v174, 64
    %v178 = vpop.permute.xlu0 %177
    %v180 = vmul.f32 %v174, %v178
    %182 = vrot.lane.b32.xlu0 %v180, 32
    %v183 = vpop.permute.xlu0 %182
    %v185 = vadd.f32 %v175, %v183
    %v186 = vtanh.pop %v185
    %188 = vrot.lane.b32.xlu0 %v186, 64
    %v189 = vpop.permute.xlu0 %188
    %v191 = vmul.f32 %v174, %v189
    %192 = vset.pattern.permute.xlu0 2
    %193 = vperm.xlu0 %192, %v78
    %v194 = vpop.permute.xlu0 %193
    %v196 = vmul.f32 %v194, %v63
    %197 = vset.pattern.permute.xlu0 3
    %198 = vperm.xlu0 %197, %v78
    %v199 = vpop.permute.xlu0 %198
    %v201 = vmul.f32 %v199, %v68
    %v202 = vadd.f32 %v196, %v201
    %v203 = vadd.f32 %v202, %v76
    %205 = vrot.lane.b32.xlu0 %v191, 32
    %v206 = vpop.permute.xlu0 %205
    %v207 = vsel %vm96, %v206, 0
    %209 = vmatprep.subr.mxu0 0.0
    %210 = vmatpush1.msra.mxu0 0.0
    %211 = vmatprep.subr.mxu0 0.0
    %212 = vmatpush1.msra.mxu0 0.0
    %213 = vmatprep.subr.mxu0 0.0
    %214 = vmatpush1.msra.mxu0 0.0
    %215 = vmatprep.subr.mxu0 0.0
    %216 = vmatpush1.msra.mxu0 0.0
    %217 = vmatprep.subr.mxu0 0.0
    %218 = vmatpush1.msra.mxu0 0.0
    %219 = vmatprep.subr.mxu0 0.0
    %220 = vmatpush1.msra.mxu0 0.0
    %221 = vmatprep.subr.mxu0 0.0
    %222 = vmatpush1.msra.mxu0 0.0
    %223 = vmatprep.subr.mxu0 0.0
    %224 = vmatpush1.msra.mxu0 0.0
    %225 = vmatprep.subr.mxu0 0.0
    %226 = vmatpush1.msra.mxu0 0.0
    %227 = vmatprep.subr.mxu0 0.0
    %228 = vmatpush1.msra.mxu0 0.0
    %229 = vmatprep.subr.mxu0 0.0
    %230 = vmatpush1.msra.mxu0 0.0
    %231 = vmatprep.subr.mxu0 0.0
    %232 = vmatpush1.msra.mxu0 0.0
    %233 = vmatprep.subr.mxu0 0.0
    %234 = vmatpush1.msra.mxu0 %v95
    %235 = vmatprep.subr.mxu0 0.0
    %236 = vmatpush1.msra.mxu0 %v94
    %237 = vmatprep.subr.mxu0 0.0
    %238 = vmatpush1.msra.mxu0 %v93
    %239 = vmatprep.subr.mxu0 0.0
    %240 = vmatpush1.msra.mxu0 %v92
    %241 = vmatprep.subr.mxu0 0.0
    %242 = vmatpush2.msra.mxu0 0.0
    %243 = vmatprep.subr.mxu0 0.0
    %244 = vmatpush2.msra.mxu0 0.0
    %245 = vmatprep.subr.mxu0 0.0
    %246 = vmatpush2.msra.mxu0 0.0
    %247 = vmatprep.subr.mxu0 0.0
    %248 = vmatpush2.msra.mxu0 0.0
    %249 = vmatprep.subr.mxu0 0.0
    %250 = vmatpush2.msra.mxu0 0.0
    %251 = vmatprep.subr.mxu0 0.0
    %252 = vmatpush2.msra.mxu0 0.0
    %253 = vmatprep.subr.mxu0 0.0
    %254 = vmatpush2.msra.mxu0 0.0
    %255 = vmatprep.subr.mxu0 0.0
    %256 = vmatpush2.msra.mxu0 0.0
    %257 = vmatprep.subr.mxu0 0.0
    %258 = vmatpush2.msra.mxu0 0.0
    %259 = vmatprep.subr.mxu0 0.0
    %260 = vmatpush2.msra.mxu0 0.0
    %261 = vmatprep.subr.mxu0 0.0
    %262 = vmatpush2.msra.mxu0 0.0
    %263 = vmatprep.subr.mxu0 0.0
    %264 = vmatpush2.msra.mxu0 0.0
    %265 = vmatprep.subr.mxu0 0.0
    %266 = vmatpush2.msra.mxu0 0.0
    %267 = vmatprep.subr.mxu0 0.0
    %268 = vmatpush2.msra.mxu0 0.0
    %269 = vmatprep.subr.mxu0 0.0
    %270 = vmatpush2.msra.mxu0 0.0
    %271 = vmatprep.subr.mxu0 0.0
    %272 = vmatpush2.msra.mxu0 0.0
    %273 = vmatprep.mubr.f32.mxu0 0.0
    %274 = vmatmul.mubr.f32.gmra.mxu0 %v207
    %v275 = vpop.f32.mrf.mxu0
    %v276 = vadd.f32 0.0, %v275
    %v277 = vpop.f32.mrf.mxu0
    %278 = vdwg.mxu0
    %v279 = vadd.f32 %v203, %v276
    %v280 = vmul.f32 %v279, %v57
    %v281 = vtanh.pop %v280
    %v282 = vmul.f32 %v281, %v57
    %v283 = vadd.f32 %v282, %v58
    %v284 = vmul.f32 %v283, %v185
    %286 = vrot.lane.b32.xlu0 %v283, 64
    %v287 = vpop.permute.xlu0 %286
    %v289 = vmul.f32 %v283, %v287
    %291 = vrot.lane.b32.xlu0 %v289, 32
    %v292 = vpop.permute.xlu0 %291
    %v294 = vadd.f32 %v284, %v292
    %v295 = vtanh.pop %v294
    %297 = vrot.lane.b32.xlu0 %v295, 64
    %v298 = vpop.permute.xlu0 %297
    %v300 = vmul.f32 %v283, %v298
    %301 = vset.pattern.permute.xlu0 4
    %302 = vperm.xlu0 %301, %v78
    %v303 = vpop.permute.xlu0 %302
    %v305 = vmul.f32 %v303, %v63
    %306 = vset.pattern.permute.xlu0 5
    %307 = vperm.xlu0 %306, %v78
    %v308 = vpop.permute.xlu0 %307
    %v310 = vmul.f32 %v308, %v68
    %v311 = vadd.f32 %v305, %v310
    %v312 = vadd.f32 %v311, %v76
    %314 = vrot.lane.b32.xlu0 %v300, 32
    %v315 = vpop.permute.xlu0 %314
    %v316 = vsel %vm96, %v315, 0
    %318 = vmatprep.subr.mxu0 0.0
    %319 = vmatpush1.msra.mxu0 0.0
    %320 = vmatprep.subr.mxu0 0.0
    %321 = vmatpush1.msra.mxu0 0.0
    %322 = vmatprep.subr.mxu0 0.0
    %323 = vmatpush1.msra.mxu0 0.0
    %324 = vmatprep.subr.mxu0 0.0
    %325 = vmatpush1.msra.mxu0 0.0
    %326 = vmatprep.subr.mxu0 0.0
    %327 = vmatpush1.msra.mxu0 0.0
    %328 = vmatprep.subr.mxu0 0.0
    %329 = vmatpush1.msra.mxu0 0.0
    %330 = vmatprep.subr.mxu0 0.0
    %331 = vmatpush1.msra.mxu0 0.0
    %332 = vmatprep.subr.mxu0 0.0
    %333 = vmatpush1.msra.mxu0 0.0
    %334 = vmatprep.subr.mxu0 0.0
    %335 = vmatpush1.msra.mxu0 0.0
    %336 = vmatprep.subr.mxu0 0.0
    %337 = vmatpush1.msra.mxu0 0.0
    %338 = vmatprep.subr.mxu0 0.0
    %339 = vmatpush1.msra.mxu0 0.0
    %340 = vmatprep.subr.mxu0 0.0
    %341 = vmatpush1.msra.mxu0 0.0
    %342 = vmatprep.subr.mxu0 0.0
    %343 = vmatpush1.msra.mxu0 %v95
    %344 = vmatprep.subr.mxu0 0.0
    %345 = vmatpush1.msra.mxu0 %v94
    %346 = vmatprep.subr.mxu0 0.0
    %347 = vmatpush1.msra.mxu0 %v93
    %348 = vmatprep.subr.mxu0 0.0
    %349 = vmatpush1.msra.mxu0 %v92
    %350 = vmatprep.subr.mxu0 0.0
    %351 = vmatpush2.msra.mxu0 0.0
    %352 = vmatprep.subr.mxu0 0.0
    %353 = vmatpush2.msra.mxu0 0.0
    %354 = vmatprep.subr.mxu0 0.0
    %355 = vmatpush2.msra.mxu0 0.0
    %356 = vmatprep.subr.mxu0 0.0
    %357 = vmatpush2.msra.mxu0 0.0
    %358 = vmatprep.subr.mxu0 0.0
    %359 = vmatpush2.msra.mxu0 0.0
    %360 = vmatprep.subr.mxu0 0.0
    %361 = vmatpush2.msra.mxu0 0.0
    %362 = vmatprep.subr.mxu0 0.0
    %363 = vmatpush2.msra.mxu0 0.0
    %364 = vmatprep.subr.mxu0 0.0
    %365 = vmatpush2.msra.mxu0 0.0
    %366 = vmatprep.subr.mxu0 0.0
    %367 = vmatpush2.msra.mxu0 0.0
    %368 = vmatprep.subr.mxu0 0.0
    %369 = vmatpush2.msra.mxu0 0.0
    %370 = vmatprep.subr.mxu0 0.0
    %371 = vmatpush2.msra.mxu0 0.0
    %372 = vmatprep.subr.mxu0 0.0
    %373 = vmatpush2.msra.mxu0 0.0
    %374 = vmatprep.subr.mxu0 0.0
    %375 = vmatpush2.msra.mxu0 0.0
    %376 = vmatprep.subr.mxu0 0.0
    %377 = vmatpush2.msra.mxu0 0.0
    %378 = vmatprep.subr.mxu0 0.0
    %379 = vmatpush2.msra.mxu0 0.0
    %380 = vmatprep.subr.mxu0 0.0
    %381 = vmatpush2.msra.mxu0 0.0
    %382 = vmatprep.mubr.f32.mxu0 0.0
    %383 = vmatmul.mubr.f32.gmra.mxu0 %v316
    %v384 = vpop.f32.mrf.mxu0
    %v385 = vadd.f32 0.0, %v384
    %v386 = vpop.f32.mrf.mxu0
    %387 = vdwg.mxu0
    %v388 = vadd.f32 %v312, %v385
    %v389 = vmul.f32 %v388, %v57
    %v390 = vtanh.pop %v389
    %v391 = vmul.f32 %v390, %v57
    %v392 = vadd.f32 %v391, %v58
    %v393 = vmul.f32 %v392, %v294
    %395 = vrot.lane.b32.xlu0 %v392, 64
    %v396 = vpop.permute.xlu0 %395
    %v398 = vmul.f32 %v392, %v396
    %400 = vrot.lane.b32.xlu0 %v398, 32
    %v401 = vpop.permute.xlu0 %400
    %v403 = vadd.f32 %v393, %v401
    %v404 = vtanh.pop %v403
    %406 = vrot.lane.b32.xlu0 %v404, 64
    %v407 = vpop.permute.xlu0 %406
    %v409 = vmul.f32 %v392, %v407
    %410 = vset.pattern.permute.xlu0 6
    %411 = vperm.xlu0 %410, %v78
    %v412 = vpop.permute.xlu0 %411
    %v414 = vmul.f32 %v412, %v63
    %415 = vset.pattern.permute.xlu0 7
    %416 = vperm.xlu0 %415, %v78
    %v417 = vpop.permute.xlu0 %416
    %v419 = vmul.f32 %v417, %v68
    %v420 = vadd.f32 %v414, %v419
    %v421 = vadd.f32 %v420, %v76
    %423 = vrot.lane.b32.xlu0 %v409, 32
    %v424 = vpop.permute.xlu0 %423
    %v425 = vsel %vm96, %v424, 0
    %427 = vmatprep.subr.mxu0 0.0
    %428 = vmatpush1.msra.mxu0 0.0
    %429 = vmatprep.subr.mxu0 0.0
    %430 = vmatpush1.msra.mxu0 0.0
    %431 = vmatprep.subr.mxu0 0.0
    %432 = vmatpush1.msra.mxu0 0.0
    %433 = vmatprep.subr.mxu0 0.0
    %434 = vmatpush1.msra.mxu0 0.0
    %435 = vmatprep.subr.mxu0 0.0
    %436 = vmatpush1.msra.mxu0 0.0
    %437 = vmatprep.subr.mxu0 0.0
    %438 = vmatpush1.msra.mxu0 0.0
    %439 = vmatprep.subr.mxu0 0.0
    %440 = vmatpush1.msra.mxu0 0.0
    %441 = vmatprep.subr.mxu0 0.0
    %442 = vmatpush1.msra.mxu0 0.0
    %443 = vmatprep.subr.mxu0 0.0
    %444 = vmatpush1.msra.mxu0 0.0
    %445 = vmatprep.subr.mxu0 0.0
    %446 = vmatpush1.msra.mxu0 0.0
    %447 = vmatprep.subr.mxu0 0.0
    %448 = vmatpush1.msra.mxu0 0.0
    %449 = vmatprep.subr.mxu0 0.0
    %450 = vmatpush1.msra.mxu0 0.0
    %451 = vmatprep.subr.mxu0 0.0
    %452 = vmatpush1.msra.mxu0 %v95
    %453 = vmatprep.subr.mxu0 0.0
    %454 = vmatpush1.msra.mxu0 %v94
    %455 = vmatprep.subr.mxu0 0.0
    %456 = vmatpush1.msra.mxu0 %v93
    %457 = vmatprep.subr.mxu0 0.0
    %458 = vmatpush1.msra.mxu0 %v92
    %459 = vmatprep.subr.mxu0 0.0
    %460 = vmatpush2.msra.mxu0 0.0
    %461 = vmatprep.subr.mxu0 0.0
    %462 = vmatpush2.msra.mxu0 0.0
    %463 = vmatprep.subr.mxu0 0.0
    %464 = vmatpush2.msra.mxu0 0.0
    %465 = vmatprep.subr.mxu0 0.0
    %466 = vmatpush2.msra.mxu0 0.0
    %467 = vmatprep.subr.mxu0 0.0
    %468 = vmatpush2.msra.mxu0 0.0
    %469 = vmatprep.subr.mxu0 0.0
    %470 = vmatpush2.msra.mxu0 0.0
    %471 = vmatprep.subr.mxu0 0.0
    %472 = vmatpush2.msra.mxu0 0.0
    %473 = vmatprep.subr.mxu0 0.0
    %474 = vmatpush2.msra.mxu0 0.0
    %475 = vmatprep.subr.mxu0 0.0
    %476 = vmatpush2.msra.mxu0 0.0
    %477 = vmatprep.subr.mxu0 0.0
    %478 = vmatpush2.msra.mxu0 0.0
    %479 = vmatprep.subr.mxu0 0.0
    %480 = vmatpush2.msra.mxu0 0.0
    %481 = vmatprep.subr.mxu0 0.0
    %482 = vmatpush2.msra.mxu0 0.0
    %483 = vmatprep.subr.mxu0 0.0
    %484 = vmatpush2.msra.mxu0 0.0
    %485 = vmatprep.subr.mxu0 0.0
    %486 = vmatpush2.msra.mxu0 0.0
    %487 = vmatprep.subr.mxu0 0.0
    %488 = vmatpush2.msra.mxu0 0.0
    %489 = vmatprep.subr.mxu0 0.0
    %490 = vmatpush2.msra.mxu0 0.0
    %491 = vmatprep.mubr.f32.mxu0 0.0
    %492 = vmatmul.mubr.f32.gmra.mxu0 %v425
    %v493 = vpop.f32.mrf.mxu0
    %v494 = vadd.f32 0.0, %v493
    %v495 = vpop.f32.mrf.mxu0
    %496 = vdwg.mxu0
    %v497 = vadd.f32 %v421, %v494
    %v498 = vmul.f32 %v497, %v57
    %v499 = vtanh.pop %v498
    %v500 = vmul.f32 %v499, %v57
    %v501 = vadd.f32 %v500, %v58
    %v502 = vmul.f32 %v501, %v403
    %504 = vrot.lane.b32.xlu0 %v501, 64
    %v505 = vpop.permute.xlu0 %504
    %v507 = vmul.f32 %v501, %v505
    %509 = vrot.lane.b32.xlu0 %v507, 32
    %v510 = vpop.permute.xlu0 %509
    %v512 = vadd.f32 %v502, %v510
    %v513 = vtanh.pop %v512
    %515 = vrot.lane.b32.xlu0 %v513, 64
    %v516 = vpop.permute.xlu0 %515
    %v518 = vmul.f32 %v501, %v516
    %519 = vset.pattern.permute.xlu0 8
    %520 = vperm.xlu0 %519, %v78
    %v521 = vpop.permute.xlu0 %520
    %v523 = vmul.f32 %v521, %v63
    %524 = vset.pattern.permute.xlu0 9
    %525 = vperm.xlu0 %524, %v78
    %v526 = vpop.permute.xlu0 %525
    %v528 = vmul.f32 %v526, %v68
    %v529 = vadd.f32 %v523, %v528
    %v530 = vadd.f32 %v529, %v76
    %532 = vrot.lane.b32.xlu0 %v518, 32
    %v533 = vpop.permute.xlu0 %532
    %v534 = vsel %vm96, %v533, 0
    %536 = vmatprep.subr.mxu0 0.0
    %537 = vmatpush1.msra.mxu0 0.0
    %538 = vmatprep.subr.mxu0 0.0
    %539 = vmatpush1.msra.mxu0 0.0
    %540 = vmatprep.subr.mxu0 0.0
    %541 = vmatpush1.msra.mxu0 0.0
    %542 = vmatprep.subr.mxu0 0.0
    %543 = vmatpush1.msra.mxu0 0.0
    %544 = vmatprep.subr.mxu0 0.0
    %545 = vmatpush1.msra.mxu0 0.0
    %546 = vmatprep.subr.mxu0 0.0
    %547 = vmatpush1.msra.mxu0 0.0
    %548 = vmatprep.subr.mxu0 0.0
    %549 = vmatpush1.msra.mxu0 0.0
    %550 = vmatprep.subr.mxu0 0.0
    %551 = vmatpush1.msra.mxu0 0.0
    %552 = vmatprep.subr.mxu0 0.0
    %553 = vmatpush1.msra.mxu0 0.0
    %554 = vmatprep.subr.mxu0 0.0
    %555 = vmatpush1.msra.mxu0 0.0
    %556 = vmatprep.subr.mxu0 0.0
    %557 = vmatpush1.msra.mxu0 0.0
    %558 = vmatprep.subr.mxu0 0.0
    %559 = vmatpush1.msra.mxu0 0.0
    %560 = vmatprep.subr.mxu0 0.0
    %561 = vmatpush1.msra.mxu0 %v95
    %562 = vmatprep.subr.mxu0 0.0
    %563 = vmatpush1.msra.mxu0 %v94
    %564 = vmatprep.subr.mxu0 0.0
    %565 = vmatpush1.msra.mxu0 %v93
    %566 = vmatprep.subr.mxu0 0.0
    %567 = vmatpush1.msra.mxu0 %v92
    %568 = vmatprep.subr.mxu0 0.0
    %569 = vmatpush2.msra.mxu0 0.0
    %570 = vmatprep.subr.mxu0 0.0
    %571 = vmatpush2.msra.mxu0 0.0
    %572 = vmatprep.subr.mxu0 0.0
    %573 = vmatpush2.msra.mxu0 0.0
    %574 = vmatprep.subr.mxu0 0.0
    %575 = vmatpush2.msra.mxu0 0.0
    %576 = vmatprep.subr.mxu0 0.0
    %577 = vmatpush2.msra.mxu0 0.0
    %578 = vmatprep.subr.mxu0 0.0
    %579 = vmatpush2.msra.mxu0 0.0
    %580 = vmatprep.subr.mxu0 0.0
    %581 = vmatpush2.msra.mxu0 0.0
    %582 = vmatprep.subr.mxu0 0.0
    %583 = vmatpush2.msra.mxu0 0.0
    %584 = vmatprep.subr.mxu0 0.0
    %585 = vmatpush2.msra.mxu0 0.0
    %586 = vmatprep.subr.mxu0 0.0
    %587 = vmatpush2.msra.mxu0 0.0
    %588 = vmatprep.subr.mxu0 0.0
    %589 = vmatpush2.msra.mxu0 0.0
    %590 = vmatprep.subr.mxu0 0.0
    %591 = vmatpush2.msra.mxu0 0.0
    %592 = vmatprep.subr.mxu0 0.0
    %593 = vmatpush2.msra.mxu0 0.0
    %594 = vmatprep.subr.mxu0 0.0
    %595 = vmatpush2.msra.mxu0 0.0
    %596 = vmatprep.subr.mxu0 0.0
    %597 = vmatpush2.msra.mxu0 0.0
    %598 = vmatprep.subr.mxu0 0.0
    %599 = vmatpush2.msra.mxu0 0.0
    %600 = vmatprep.mubr.f32.mxu0 0.0
    %601 = vmatmul.mubr.f32.gmra.mxu0 %v534
    %v602 = vpop.f32.mrf.mxu0
    %v603 = vadd.f32 0.0, %v602
    %v604 = vpop.f32.mrf.mxu0
    %605 = vdwg.mxu0
    %v606 = vadd.f32 %v530, %v603
    %v607 = vmul.f32 %v606, %v57
    %v608 = vtanh.pop %v607
    %v609 = vmul.f32 %v608, %v57
    %v610 = vadd.f32 %v609, %v58
    %v611 = vmul.f32 %v610, %v512
    %613 = vrot.lane.b32.xlu0 %v610, 64
    %v614 = vpop.permute.xlu0 %613
    %v616 = vmul.f32 %v610, %v614
    %618 = vrot.lane.b32.xlu0 %v616, 32
    %v619 = vpop.permute.xlu0 %618
    %v621 = vadd.f32 %v611, %v619
    %v622 = vtanh.pop %v621
    %624 = vrot.lane.b32.xlu0 %v622, 64
    %v625 = vpop.permute.xlu0 %624
    %v627 = vmul.f32 %v610, %v625
    %628 = vset.pattern.permute.xlu0 10
    %629 = vperm.xlu0 %628, %v78
    %v630 = vpop.permute.xlu0 %629
    %v632 = vmul.f32 %v630, %v63
    %633 = vset.pattern.permute.xlu0 11
    %634 = vperm.xlu0 %633, %v78
    %v635 = vpop.permute.xlu0 %634
    %v637 = vmul.f32 %v635, %v68
    %v638 = vadd.f32 %v632, %v637
    %v639 = vadd.f32 %v638, %v76
    %641 = vrot.lane.b32.xlu0 %v627, 32
    %v642 = vpop.permute.xlu0 %641
    %v643 = vsel %vm96, %v642, 0
    %645 = vmatprep.subr.mxu0 0.0
    %646 = vmatpush1.msra.mxu0 0.0
    %647 = vmatprep.subr.mxu0 0.0
    %648 = vmatpush1.msra.mxu0 0.0
    %649 = vmatprep.subr.mxu0 0.0
    %650 = vmatpush1.msra.mxu0 0.0
    %651 = vmatprep.subr.mxu0 0.0
    %652 = vmatpush1.msra.mxu0 0.0
    %653 = vmatprep.subr.mxu0 0.0
    %654 = vmatpush1.msra.mxu0 0.0
    %655 = vmatprep.subr.mxu0 0.0
    %656 = vmatpush1.msra.mxu0 0.0
    %657 = vmatprep.subr.mxu0 0.0
    %658 = vmatpush1.msra.mxu0 0.0
    %659 = vmatprep.subr.mxu0 0.0
    %660 = vmatpush1.msra.mxu0 0.0
    %661 = vmatprep.subr.mxu0 0.0
    %662 = vmatpush1.msra.mxu0 0.0
    %663 = vmatprep.subr.mxu0 0.0
    %664 = vmatpush1.msra.mxu0 0.0
    %665 = vmatprep.subr.mxu0 0.0
    %666 = vmatpush1.msra.mxu0 0.0
    %667 = vmatprep.subr.mxu0 0.0
    %668 = vmatpush1.msra.mxu0 0.0
    %669 = vmatprep.subr.mxu0 0.0
    %670 = vmatpush1.msra.mxu0 %v95
    %671 = vmatprep.subr.mxu0 0.0
    %672 = vmatpush1.msra.mxu0 %v94
    %673 = vmatprep.subr.mxu0 0.0
    %674 = vmatpush1.msra.mxu0 %v93
    %675 = vmatprep.subr.mxu0 0.0
    %676 = vmatpush1.msra.mxu0 %v92
    %677 = vmatprep.subr.mxu0 0.0
    %678 = vmatpush2.msra.mxu0 0.0
    %679 = vmatprep.subr.mxu0 0.0
    %680 = vmatpush2.msra.mxu0 0.0
    %681 = vmatprep.subr.mxu0 0.0
    %682 = vmatpush2.msra.mxu0 0.0
    %683 = vmatprep.subr.mxu0 0.0
    %684 = vmatpush2.msra.mxu0 0.0
    %685 = vmatprep.subr.mxu0 0.0
    %686 = vmatpush2.msra.mxu0 0.0
    %687 = vmatprep.subr.mxu0 0.0
    %688 = vmatpush2.msra.mxu0 0.0
    %689 = vmatprep.subr.mxu0 0.0
    %690 = vmatpush2.msra.mxu0 0.0
    %691 = vmatprep.subr.mxu0 0.0
    %692 = vmatpush2.msra.mxu0 0.0
    %693 = vmatprep.subr.mxu0 0.0
    %694 = vmatpush2.msra.mxu0 0.0
    %695 = vmatprep.subr.mxu0 0.0
    %696 = vmatpush2.msra.mxu0 0.0
    %697 = vmatprep.subr.mxu0 0.0
    %698 = vmatpush2.msra.mxu0 0.0
    %699 = vmatprep.subr.mxu0 0.0
    %700 = vmatpush2.msra.mxu0 0.0
    %701 = vmatprep.subr.mxu0 0.0
    %702 = vmatpush2.msra.mxu0 0.0
    %703 = vmatprep.subr.mxu0 0.0
    %704 = vmatpush2.msra.mxu0 0.0
    %705 = vmatprep.subr.mxu0 0.0
    %706 = vmatpush2.msra.mxu0 0.0
    %707 = vmatprep.subr.mxu0 0.0
    %708 = vmatpush2.msra.mxu0 0.0
    %709 = vmatprep.mubr.f32.mxu0 0.0
    %710 = vmatmul.mubr.f32.gmra.mxu0 %v643
    %v711 = vpop.f32.mrf.mxu0
    %v712 = vadd.f32 0.0, %v711
    %v713 = vpop.f32.mrf.mxu0
    %714 = vdwg.mxu0
    %v715 = vadd.f32 %v639, %v712
    %v716 = vmul.f32 %v715, %v57
    %v717 = vtanh.pop %v716
    %v718 = vmul.f32 %v717, %v57
    %v719 = vadd.f32 %v718, %v58
    %v720 = vmul.f32 %v719, %v621
    %722 = vrot.lane.b32.xlu0 %v719, 64
    %v723 = vpop.permute.xlu0 %722
    %v725 = vmul.f32 %v719, %v723
    %727 = vrot.lane.b32.xlu0 %v725, 32
    %v728 = vpop.permute.xlu0 %727
    %v730 = vadd.f32 %v720, %v728
    %v731 = vtanh.pop %v730
    %733 = vrot.lane.b32.xlu0 %v731, 64
    %v734 = vpop.permute.xlu0 %733
    %v736 = vmul.f32 %v719, %v734
    %737 = vset.pattern.permute.xlu0 12
    %738 = vperm.xlu0 %737, %v78
    %v739 = vpop.permute.xlu0 %738
    %v741 = vmul.f32 %v739, %v63
    %742 = vset.pattern.permute.xlu0 13
    %743 = vperm.xlu0 %742, %v78
    %v744 = vpop.permute.xlu0 %743
    %v746 = vmul.f32 %v744, %v68
    %v747 = vadd.f32 %v741, %v746
    %v748 = vadd.f32 %v747, %v76
    %750 = vrot.lane.b32.xlu0 %v736, 32
    %v751 = vpop.permute.xlu0 %750
    %v752 = vsel %vm96, %v751, 0
    %754 = vmatprep.subr.mxu0 0.0
    %755 = vmatpush1.msra.mxu0 0.0
    %756 = vmatprep.subr.mxu0 0.0
    %757 = vmatpush1.msra.mxu0 0.0
    %758 = vmatprep.subr.mxu0 0.0
    %759 = vmatpush1.msra.mxu0 0.0
    %760 = vmatprep.subr.mxu0 0.0
    %761 = vmatpush1.msra.mxu0 0.0
    %762 = vmatprep.subr.mxu0 0.0
    %763 = vmatpush1.msra.mxu0 0.0
    %764 = vmatprep.subr.mxu0 0.0
    %765 = vmatpush1.msra.mxu0 0.0
    %766 = vmatprep.subr.mxu0 0.0
    %767 = vmatpush1.msra.mxu0 0.0
    %768 = vmatprep.subr.mxu0 0.0
    %769 = vmatpush1.msra.mxu0 0.0
    %770 = vmatprep.subr.mxu0 0.0
    %771 = vmatpush1.msra.mxu0 0.0
    %772 = vmatprep.subr.mxu0 0.0
    %773 = vmatpush1.msra.mxu0 0.0
    %774 = vmatprep.subr.mxu0 0.0
    %775 = vmatpush1.msra.mxu0 0.0
    %776 = vmatprep.subr.mxu0 0.0
    %777 = vmatpush1.msra.mxu0 0.0
    %778 = vmatprep.subr.mxu0 0.0
    %779 = vmatpush1.msra.mxu0 %v95
    %780 = vmatprep.subr.mxu0 0.0
    %781 = vmatpush1.msra.mxu0 %v94
    %782 = vmatprep.subr.mxu0 0.0
    %783 = vmatpush1.msra.mxu0 %v93
    %784 = vmatprep.subr.mxu0 0.0
    %785 = vmatpush1.msra.mxu0 %v92
    %786 = vmatprep.subr.mxu0 0.0
    %787 = vmatpush2.msra.mxu0 0.0
    %788 = vmatprep.subr.mxu0 0.0
    %789 = vmatpush2.msra.mxu0 0.0
    %790 = vmatprep.subr.mxu0 0.0
    %791 = vmatpush2.msra.mxu0 0.0
    %792 = vmatprep.subr.mxu0 0.0
    %793 = vmatpush2.msra.mxu0 0.0
    %794 = vmatprep.subr.mxu0 0.0
    %795 = vmatpush2.msra.mxu0 0.0
    %796 = vmatprep.subr.mxu0 0.0
    %797 = vmatpush2.msra.mxu0 0.0
    %798 = vmatprep.subr.mxu0 0.0
    %799 = vmatpush2.msra.mxu0 0.0
    %800 = vmatprep.subr.mxu0 0.0
    %801 = vmatpush2.msra.mxu0 0.0
    %802 = vmatprep.subr.mxu0 0.0
    %803 = vmatpush2.msra.mxu0 0.0
    %804 = vmatprep.subr.mxu0 0.0
    %805 = vmatpush2.msra.mxu0 0.0
    %806 = vmatprep.subr.mxu0 0.0
    %807 = vmatpush2.msra.mxu0 0.0
    %808 = vmatprep.subr.mxu0 0.0
    %809 = vmatpush2.msra.mxu0 0.0
    %810 = vmatprep.subr.mxu0 0.0
    %811 = vmatpush2.msra.mxu0 0.0
    %812 = vmatprep.subr.mxu0 0.0
    %813 = vmatpush2.msra.mxu0 0.0
    %814 = vmatprep.subr.mxu0 0.0
    %815 = vmatpush2.msra.mxu0 0.0
    %816 = vmatprep.subr.mxu0 0.0
    %817 = vmatpush2.msra.mxu0 0.0
    %818 = vmatprep.mubr.f32.mxu0 0.0
    %819 = vmatmul.mubr.f32.gmra.mxu0 %v752
    %v820 = vpop.f32.mrf.mxu0
    %v821 = vadd.f32 0.0, %v820
    %v822 = vpop.f32.mrf.mxu0
    %823 = vdwg.mxu0
    %v824 = vadd.f32 %v748, %v821
    %v825 = vmul.f32 %v824, %v57
    %v826 = vtanh.pop %v825
    %v827 = vmul.f32 %v826, %v57
    %v828 = vadd.f32 %v827, %v58
    %v829 = vmul.f32 %v828, %v730
    %831 = vrot.lane.b32.xlu0 %v828, 64
    %v832 = vpop.permute.xlu0 %831
    %v834 = vmul.f32 %v828, %v832
    %836 = vrot.lane.b32.xlu0 %v834, 32
    %v837 = vpop.permute.xlu0 %836
    %v839 = vadd.f32 %v829, %v837
    %v840 = vtanh.pop %v839
    %842 = vrot.lane.b32.xlu0 %v840, 64
    %v843 = vpop.permute.xlu0 %842
    %v845 = vmul.f32 %v828, %v843
    %846 = vset.pattern.permute.xlu0 14
    %847 = vperm.xlu0 %846, %v78
    %v848 = vpop.permute.xlu0 %847
    %v850 = vmul.f32 %v848, %v63
    %851 = vset.pattern.permute.xlu0 15
    %852 = vperm.xlu0 %851, %v78
    %v853 = vpop.permute.xlu0 %852
    %v855 = vmul.f32 %v853, %v68
    %v856 = vadd.f32 %v850, %v855
    %v857 = vadd.f32 %v856, %v76
    %859 = vrot.lane.b32.xlu0 %v845, 32
    %v860 = vpop.permute.xlu0 %859
    %v861 = vsel %vm96, %v860, 0
    %863 = vmatprep.subr.mxu0 0.0
    %864 = vmatpush1.msra.mxu0 0.0
    %865 = vmatprep.subr.mxu0 0.0
    %866 = vmatpush1.msra.mxu0 0.0
    %867 = vmatprep.subr.mxu0 0.0
    %868 = vmatpush1.msra.mxu0 0.0
    %869 = vmatprep.subr.mxu0 0.0
    %870 = vmatpush1.msra.mxu0 0.0
    %871 = vmatprep.subr.mxu0 0.0
    %872 = vmatpush1.msra.mxu0 0.0
    %873 = vmatprep.subr.mxu0 0.0
    %874 = vmatpush1.msra.mxu0 0.0
    %875 = vmatprep.subr.mxu0 0.0
    %876 = vmatpush1.msra.mxu0 0.0
    %877 = vmatprep.subr.mxu0 0.0
    %878 = vmatpush1.msra.mxu0 0.0
    %879 = vmatprep.subr.mxu0 0.0
    %880 = vmatpush1.msra.mxu0 0.0
    %881 = vmatprep.subr.mxu0 0.0
    %882 = vmatpush1.msra.mxu0 0.0
    %883 = vmatprep.subr.mxu0 0.0
    %884 = vmatpush1.msra.mxu0 0.0
    %885 = vmatprep.subr.mxu0 0.0
    %886 = vmatpush1.msra.mxu0 0.0
    %887 = vmatprep.subr.mxu0 0.0
    %888 = vmatpush1.msra.mxu0 %v95
    %889 = vmatprep.subr.mxu0 0.0
    %890 = vmatpush1.msra.mxu0 %v94
    %891 = vmatprep.subr.mxu0 0.0
    %892 = vmatpush1.msra.mxu0 %v93
    %893 = vmatprep.subr.mxu0 0.0
    %894 = vmatpush1.msra.mxu0 %v92
    %895 = vmatprep.subr.mxu0 0.0
    %896 = vmatpush2.msra.mxu0 0.0
    %897 = vmatprep.subr.mxu0 0.0
    %898 = vmatpush2.msra.mxu0 0.0
    %899 = vmatprep.subr.mxu0 0.0
    %900 = vmatpush2.msra.mxu0 0.0
    %901 = vmatprep.subr.mxu0 0.0
    %902 = vmatpush2.msra.mxu0 0.0
    %903 = vmatprep.subr.mxu0 0.0
    %904 = vmatpush2.msra.mxu0 0.0
    %905 = vmatprep.subr.mxu0 0.0
    %906 = vmatpush2.msra.mxu0 0.0
    %907 = vmatprep.subr.mxu0 0.0
    %908 = vmatpush2.msra.mxu0 0.0
    %909 = vmatprep.subr.mxu0 0.0
    %910 = vmatpush2.msra.mxu0 0.0
    %911 = vmatprep.subr.mxu0 0.0
    %912 = vmatpush2.msra.mxu0 0.0
    %913 = vmatprep.subr.mxu0 0.0
    %914 = vmatpush2.msra.mxu0 0.0
    %915 = vmatprep.subr.mxu0 0.0
    %916 = vmatpush2.msra.mxu0 0.0
    %917 = vmatprep.subr.mxu0 0.0
    %918 = vmatpush2.msra.mxu0 0.0
    %919 = vmatprep.subr.mxu0 0.0
    %920 = vmatpush2.msra.mxu0 0.0
    %921 = vmatprep.subr.mxu0 0.0
    %922 = vmatpush2.msra.mxu0 0.0
    %923 = vmatprep.subr.mxu0 0.0
    %924 = vmatpush2.msra.mxu0 0.0
    %925 = vmatprep.subr.mxu0 0.0
    %926 = vmatpush2.msra.mxu0 0.0
    %927 = vmatprep.mubr.f32.mxu0 0.0
    %928 = vmatmul.mubr.f32.gmra.mxu0 %v861
    %v929 = vpop.f32.mrf.mxu0
    %v930 = vadd.f32 0.0, %v929
    %v931 = vpop.f32.mrf.mxu0
    %932 = vdwg.mxu0
    %v933 = vadd.f32 %v857, %v930
    %v934 = vmul.f32 %v933, %v57
    %v935 = vtanh.pop %v934
    %v936 = vmul.f32 %v935, %v57
    %v937 = vadd.f32 %v936, %v58
    %v938 = vmul.f32 %v937, %v839
    %940 = vrot.lane.b32.xlu0 %v937, 64
    %v941 = vpop.permute.xlu0 %940
    %v943 = vmul.f32 %v937, %v941
    %945 = vrot.lane.b32.xlu0 %v943, 32
    %v946 = vpop.permute.xlu0 %945
    %v948 = vadd.f32 %v938, %v946
    %v949 = vtanh.pop %v948
    %951 = vrot.lane.b32.xlu0 %v949, 64
    %v952 = vpop.permute.xlu0 %951
    %v954 = vmul.f32 %v937, %v952
    %v955 = vld [vmem:[%s5] sm:$0xff]
    %v956 = vld [vmem:[%s5 + $0x8] sm:$0xff]
    %v957 = vld [vmem:[%s5 + $0x10] sm:$0xff]
    %v958 = vld [vmem:[%s5 + $0x18] sm:$0xff]
    %v959 = vld [vmem:[%s6] sm:$0x1]
    %v961 = vlaneseq
    %v962 = vshrl.u32 %v961, 7
    %v963 = vsub.s32 0, %v962
    %v964 = vrot.slane %v959, %v963
    %967 = vrot.lane.b32.xlu0 %v954, 32
    %v968 = vpop.permute.xlu0 %967
    %v969 = vsel %vm96, %v968, 0
    %971 = vmatprep.subr.mxu0 0.0
    %972 = vmatpush1.msra.mxu0 0.0
    %973 = vmatprep.subr.mxu0 0.0
    %974 = vmatpush1.msra.mxu0 0.0
    %975 = vmatprep.subr.mxu0 0.0
    %976 = vmatpush1.msra.mxu0 0.0
    %977 = vmatprep.subr.mxu0 0.0
    %978 = vmatpush1.msra.mxu0 0.0
    %979 = vmatprep.subr.mxu0 0.0
    %980 = vmatpush1.msra.mxu0 0.0
    %981 = vmatprep.subr.mxu0 0.0
    %982 = vmatpush1.msra.mxu0 0.0
    %983 = vmatprep.subr.mxu0 0.0
    %984 = vmatpush1.msra.mxu0 0.0
    %985 = vmatprep.subr.mxu0 0.0
    %986 = vmatpush1.msra.mxu0 0.0
    %987 = vmatprep.subr.mxu0 0.0
    %988 = vmatpush1.msra.mxu0 0.0
    %989 = vmatprep.subr.mxu0 0.0
    %990 = vmatpush1.msra.mxu0 0.0
    %991 = vmatprep.subr.mxu0 0.0
    %992 = vmatpush1.msra.mxu0 0.0
    %993 = vmatprep.subr.mxu0 0.0
    %994 = vmatpush1.msra.mxu0 0.0
    %995 = vmatprep.subr.mxu0 0.0
    %996 = vmatpush1.msra.mxu0 %v958
    %997 = vmatprep.subr.mxu0 0.0
    %998 = vmatpush1.msra.mxu0 %v957
    %999 = vmatprep.subr.mxu0 0.0
    %1000 = vmatpush1.msra.mxu0 %v956
    %1001 = vmatprep.subr.mxu0 0.0
    %1002 = vmatpush1.msra.mxu0 %v955
    %1003 = vmatprep.subr.mxu0 0.0
    %1004 = vmatpush2.msra.mxu0 0.0
    %1005 = vmatprep.subr.mxu0 0.0
    %1006 = vmatpush2.msra.mxu0 0.0
    %1007 = vmatprep.subr.mxu0 0.0
    %1008 = vmatpush2.msra.mxu0 0.0
    %1009 = vmatprep.subr.mxu0 0.0
    %1010 = vmatpush2.msra.mxu0 0.0
    %1011 = vmatprep.subr.mxu0 0.0
    %1012 = vmatpush2.msra.mxu0 0.0
    %1013 = vmatprep.subr.mxu0 0.0
    %1014 = vmatpush2.msra.mxu0 0.0
    %1015 = vmatprep.subr.mxu0 0.0
    %1016 = vmatpush2.msra.mxu0 0.0
    %1017 = vmatprep.subr.mxu0 0.0
    %1018 = vmatpush2.msra.mxu0 0.0
    %1019 = vmatprep.subr.mxu0 0.0
    %1020 = vmatpush2.msra.mxu0 0.0
    %1021 = vmatprep.subr.mxu0 0.0
    %1022 = vmatpush2.msra.mxu0 0.0
    %1023 = vmatprep.subr.mxu0 0.0
    %1024 = vmatpush2.msra.mxu0 0.0
    %1025 = vmatprep.subr.mxu0 0.0
    %1026 = vmatpush2.msra.mxu0 0.0
    %1027 = vmatprep.subr.mxu0 0.0
    %1028 = vmatpush2.msra.mxu0 0.0
    %1029 = vmatprep.subr.mxu0 0.0
    %1030 = vmatpush2.msra.mxu0 0.0
    %1031 = vmatprep.subr.mxu0 0.0
    %1032 = vmatpush2.msra.mxu0 0.0
    %1033 = vmatprep.subr.mxu0 0.0
    %1034 = vmatpush2.msra.mxu0 0.0
    %1035 = vmatprep.mubr.f32.mxu0 0.0
    %1036 = vmatmul.mubr.f32.gmra.mxu0 %v969
    %v1037 = vpop.f32.mrf.mxu0
    %v1038 = vadd.f32 %v964, %v1037
    %v1039 = vpop.f32.mrf.mxu0
    %1040 = vdwg.mxu0
    %vm1041 = vcmask 130048
    %1042 = vst.msk [vmem:[%s7] sm:$0xff] %vm1041, %v1038
    %v1043 = vmax.f32 %v1038, 0.0
    %v1044 = vand.u32 2147483647, %v1038
    %v1045 = vsub.f32 0.0, %v1044
    %v1046 = vmul.f32 %v1045, 1.442695
    %v1047 = vpow.pop %v1046
    %v1048 = vadd.f32 %v1047, 1.0
    %v1049 = vlog2.pop %v1048
    %v1050 = vmul.f32 %v1049, 0.6931472
    %v1051 = vadd.f32 %v1043, %v1050
    %1053 = vrot.lane.b32.xlu0 %v1051, 112
    %v1054 = vpop.permute.xlu0 %1053
    %1056 = vst.msk [vmem:[%s8] sm:$0xff] %vm1041, %v1054
    // Predicated region
    $region38: #{encoder_seq_forward.1} parent=1 // pred_check
      _
    $region39: #{encoder_seq_forward.1} parent=1 // pred_check_branch
      %1058 = sbr.rel (0) target = $region41
    $region40: #{encoder_seq_forward.1} parent=1 // pred_region
      _
    $region41: #{encoder_seq_forward.1} parent=1 // pred_fallthru
      _
    // Predicated region
    $region42: #{encoder_seq_forward.1} parent=1 // pred_check
      _
    $region43: #{encoder_seq_forward.1} parent=1 // pred_check_branch
      %1060 = sbr.rel (0) target = $region45
    $region44: #{encoder_seq_forward.1} parent=1 // pred_region
      _
    $region45: #{encoder_seq_forward.1} parent=1 // pred_fallthru
      _
    // Predicated region
    $region46: #{encoder_seq_forward.1} parent=1 // pred_check
      _
    $region47: #{encoder_seq_forward.1} parent=1 // pred_check_branch
      %1062 = sbr.rel (0) target = $region49
    $region48: #{encoder_seq_forward.1} parent=1 // pred_region
      _
    $region49: #{encoder_seq_forward.1} parent=1 // pred_fallthru
      _
    // Predicated region
    $region50: #{encoder_seq_forward.1} parent=1 // pred_check
      _
    $region51: #{encoder_seq_forward.1} parent=1 // pred_check_branch
      %1064 = sbr.rel (0) target = $region53
    $region52: #{encoder_seq_forward.1} parent=1 // pred_region
      _
    $region53: #{encoder_seq_forward.1} parent=1 // pred_fallthru
      _
    %1065 = vsyncpa [#allocation3], 1
    %1066 = vsyncpa [#allocation5], 1

</llo_original>
